<compile_context>
chip_gen: v5e
topology: v5e:2x2
jax: 0.10.0
libtpu: 0.0.40
codegen_flags: <defaults>
</compile_context>

<pallas_src>
import jax
import jax.numpy as jnp
from jax.experimental import pallas as pl
from jax.experimental.pallas import tpu as pltpu


def _nest_mlp_kernel(x_ref, w_ref, b_ref, o_ref):
    # MXU matmul (bf16 or f32 operands, f32 accumulation), VPU bias + ReLU.
    y = jnp.dot(x_ref[...], w_ref[...], preferred_element_type=jnp.float32)
    o_ref[...] = jnp.maximum(y + b_ref[...], 0.0).astype(o_ref.dtype)


def nest_mlp_forward(x, w, b, *, block_b=1024, use_bf16=True, lane_pad_out=True):
    """x: (B, 50) f32, w: (50, 30) f32, b: (30,) f32 -> (B, 30) f32."""
    B, D_in = x.shape
    D_out = w.shape[1]

    # ---- Lane-dense output: pad output features 30 -> 128 (sliced off below).
    if lane_pad_out:
        D_pad = 128
        w = jnp.pad(w, ((0, 0), (0, D_pad - D_out)))
        b = jnp.pad(b, (0, D_pad - D_out))
    else:
        D_pad = D_out

    # ---- bf16 streaming halves HBM bytes for x (dominant traffic) and W.
    in_dtype = jnp.bfloat16 if use_bf16 else x.dtype
    x_c = x.astype(in_dtype)
    w_c = w.astype(in_dtype)
    b2d = b.reshape(1, D_pad).astype(jnp.float32)  # epilogue stays f32

    # ---- Batch tiling: sublane-aligned tile, pad B up so every block is full.
    TB = max(8, min(block_b, B))
    TB = ((TB + 7) // 8) * 8
    B_pad = TB * pl.cdiv(B, TB)
    if B_pad != B:
        x_c = jnp.pad(x_c, ((0, B_pad - B), (0, 0)))
    grid = (B_pad // TB,)

    itemsize = jnp.dtype(in_dtype).itemsize
    cost = pl.CostEstimate(
        flops=2 * B_pad * D_in * D_pad,
        transcendentals=0,
        bytes_accessed=(B_pad * D_in * itemsize        # x read
                        + D_in * D_pad * itemsize      # W read
                        + D_pad * 4                    # bias read
                        + B_pad * D_pad * 4),          # output write
    )

    out = pl.pallas_call(
        _nest_mlp_kernel,
        out_shape=jax.ShapeDtypeStruct((B_pad, D_pad), jnp.float32),
        grid=grid,
        in_specs=[
            pl.BlockSpec((TB, D_in), lambda i: (i, 0)),     # x: tiled over batch
            pl.BlockSpec((D_in, D_pad), lambda i: (0, 0)),  # W: VMEM-resident
            pl.BlockSpec((1, D_pad), lambda i: (0, 0)),     # b: VMEM-resident
        ],
        out_specs=pl.BlockSpec((TB, D_pad), lambda i: (i, 0)),
        compiler_params=pltpu.CompilerParams(
            dimension_semantics=("parallel",),  # shard batch tiles across v7x TCs
        ),
        cost_estimate=cost,
    )(x_c, w_c, b2d)

    if B_pad != B or D_pad != D_out:
        out = out[:B, :D_out]
    return out


def nest_mlp_reference(x, w, b):
    return jnp.maximum(x @ w + b, 0.0)


if __name__ == "__main__":
    key = jax.random.PRNGKey(0)
    kx, kw, kb = jax.random.split(key, 3)

    B, D_in, D_out = 8, 50, 30
    bound = 1.0 / D_in ** 0.5

    # Deterministic inputs / params (mirrors nn.Linear(50, 30) shapes).
    x = jax.random.normal(kx, (B, D_in), dtype=jnp.float32)
    w = jax.random.uniform(kw, (D_in, D_out), dtype=jnp.float32,
                           minval=-bound, maxval=bound)
    b = jax.random.uniform(kb, (D_out,), dtype=jnp.float32,
                           minval=-bound, maxval=bound)

    ref = nest_mlp_reference(x, w, b)

    # Exact-precision path (f32 streaming): tight numerical check.
    out_f32 = nest_mlp_forward(x, w, b, use_bf16=False)
    jax.block_until_ready(out_f32)
    assert out_f32.shape == (B, D_out), out_f32.shape
    assert jnp.allclose(out_f32, ref, atol=1e-5, rtol=1e-5), "f32 path mismatch"

    # Default fast path (bf16 streaming, f32 accumulation): loosened tolerance.
    out = nest_mlp_forward(x, w, b)
    jax.block_until_ready(out)
    assert out.shape == (B, D_out), out.shape
    assert jnp.allclose(out, ref, atol=2e-2, rtol=2e-2), "bf16 path mismatch"

    print("KERNEL_OK")
</pallas_src>

<mosaic_0001>
module attributes {stable_mosaic.version = 11 : i64} {
  func.func @_nest_mlp_kernel(%arg0: i32, %arg1: memref<8x50xf32, #tpu.memory_space<vmem>>, %arg2: memref<50x128xf32, #tpu.memory_space<vmem>>, %arg3: memref<1x128xf32, #tpu.memory_space<vmem>>, %arg4: memref<8x128xf32, #tpu.memory_space<vmem>>) attributes {dimension_semantics = [#tpu.dimension_semantics<parallel>], iteration_bounds = array<i64: 1>, scalar_prefetch = 0 : i64, scratch_operands = 0 : i64, tpu.core_type = #tpu.core_type<tc>, window_params = [{transform_indices = @transform_0, window_bounds = array<i64: 8, 50>}, {pipeline_mode = #tpu.pipeline_mode<synchronous>, transform_indices = @transform_1, window_bounds = array<i64: 50, 128>}, {pipeline_mode = #tpu.pipeline_mode<synchronous>, transform_indices = @transform_2, window_bounds = array<i64: 1, 128>}, {transform_indices = @transform_3, window_bounds = array<i64: 8, 128>}]} {
    %c0 = arith.constant 0 : index
    %c0_0 = arith.constant 0 : index
    %0 = vector.load %arg1[%c0, %c0_0] : memref<8x50xf32, #tpu.memory_space<vmem>>, vector<8x50xf32>
    %c0_1 = arith.constant 0 : index
    %c0_2 = arith.constant 0 : index
    %1 = vector.load %arg2[%c0_1, %c0_2] : memref<50x128xf32, #tpu.memory_space<vmem>>, vector<50x128xf32>
    %cst = arith.constant dense<0.000000e+00> : vector<8x128xf32>
    %2 = tpu.matmul %0, %1, %cst {dimension_numbers = #tpu.dot_dimension_numbers<[1], [0], [0], [1], [0, 0, 1, 1], [], []>} : vector<8x50xf32>, vector<50x128xf32>, vector<8x128xf32> -> vector<8x128xf32>
    %c0_3 = arith.constant 0 : index
    %c0_4 = arith.constant 0 : index
    %3 = vector.load %arg3[%c0_3, %c0_4] : memref<1x128xf32, #tpu.memory_space<vmem>>, vector<1x128xf32>
    %4 = vector.broadcast %3 : vector<1x128xf32> to vector<8x128xf32>
    %5 = arith.addf %2, %4 : vector<8x128xf32>
    %cst_5 = arith.constant 0.000000e+00 : f32
    %6 = vector.broadcast %cst_5 : f32 to vector<8x128xf32>
    %7 = arith.maximumf %5, %6 : vector<8x128xf32>
    %c0_6 = arith.constant 0 : index
    %c0_7 = arith.constant 0 : index
    %8 = vector.load %arg4[%c0_6, %c0_7] : memref<8x128xf32, #tpu.memory_space<vmem>>, vector<8x128xf32>
    tpu.vector_store %arg4[%c0_6, %c0_7], %7 {strides = array<i32>} : memref<8x128xf32, #tpu.memory_space<vmem>>, vector<8x128xf32>,
    return
  }
  func.func @transform_0(%arg0: i32) -> (i32, i32) {
    %c0_i32 = arith.constant 0 : i32
    %c0_i32_0 = arith.constant 0 : i32
    return %arg0, %c0_i32 : i32, i32
  }
  func.func @transform_1(%arg0: i32) -> (i32, i32) {
    %c0_i32 = arith.constant 0 : i32
    %c0_i32_0 = arith.constant 0 : i32
    %c0_i32_1 = arith.constant 0 : i32
    return %c0_i32, %c0_i32_0 : i32, i32
  }
  func.func @transform_2(%arg0: i32) -> (i32, i32) {
    %c0_i32 = arith.constant 0 : i32
    %c0_i32_0 = arith.constant 0 : i32
    %c0_i32_1 = arith.constant 0 : i32
    return %c0_i32, %c0_i32_0 : i32, i32
  }
  func.func @transform_3(%arg0: i32) -> (i32, i32) {
    %c0_i32 = arith.constant 0 : i32
    %c0_i32_0 = arith.constant 0 : i32
    return %arg0, %c0_i32 : i32, i32
  }
}

</mosaic_0001>

<llo_original>
// kernel: tpu_custom_call.1
$region0: #{tpu_custom_call.1}
  #allocation0 [shape = 'u32[]', space=smem, size = 0x4, offset = 0x4, fixed_abs, tag = 'smem constant byte address 0x4 - core index']
  #allocation1 [shape = 'u32[72,128]{1,0:T(1,128)}', space=vmem, size = 0x9000, scoped, tag = 'internal scratch']
  %s0 = inlined_call_operand.hbm [shape: f32[8,50], index: 0, kind: input, shape index: {}]
  %s1 = inlined_call_operand.hbm [shape: f32[50,128], index: 1, kind: input, shape index: {}]
  %s2 = inlined_call_operand.vmem [shape: f32[1,128], index: 2, kind: input, shape index: {}]
  %s3 = inlined_call_operand.hbm [shape: f32[8,128], index: 3, kind: output, shape index: {}]
  %s4 = sld [smem:[#allocation0]]
  $region30: #{tpu_custom_call.1} parent=0
    _
  %s6 = ssub.s32 1, %s4
  %s7 = scalar_select 0, %s6, %s4
  $region1: #{tpu_custom_call.1} parent=0
    #allocation2 [shape = 'u8[4096]{0}', space=vmem, size = 0x1000, scoped, tag = 'input window, operand 0, single buffered']
    #allocation3 [shape = 's32[1]{0}', space=sflag, size = 0x4, scoped, tag = 'scoped memory for tpu_custom_call.1']
    #allocation4 [shape = 's32[1]{0}', space=sflag, size = 0x4, scoped, tag = 'scoped memory for tpu_custom_call.1']
    #allocation5 [shape = 'u8[28672]{0}', space=vmem, size = 0x7000, scoped, tag = 'input window, operand 1, single buffered']
    #allocation6 [shape = 's32[1]{0}', space=sflag, size = 0x4, scoped, tag = 'scoped memory for tpu_custom_call.1']
    #allocation7 [shape = 'u8[4096]{0}', space=vmem, size = 0x1000, scoped, tag = 'output window, operand 0, single buffered']
    %8 = vsyncpa [#allocation3], 0
    %9 = vsyncpa [#allocation6], 0
    %10 = vsyncpa [#allocation4], 0
    // Predicated region
    $region2: #{tpu_custom_call.1} parent=1 // pred_check
      _
    $region3: #{tpu_custom_call.1} parent=1 // pred_check_branch
      %12 = sbr.rel (0) target = $region5
    $region4: #{tpu_custom_call.1} parent=1 // pred_region
      %14 = vsyncadd [#allocation3], 0
      %s16 = sshll.u32 %s0, 4
      %s17 = int_to_ptr.hbm [resolvable:$true] %s16
      %s18 = sshll.u32 [#allocation2], 4
      %s19 = int_to_ptr.vmem [resolvable:$true] %s18
      %21 = dma.hbm_to_vmem [thread:$0]  %s17, 128, %s19, [#allocation3]
    $region5: #{tpu_custom_call.1} parent=1 // pred_fallthru
      _
    // Predicated region
    $region6: #{tpu_custom_call.1} parent=1 // pred_check
      _
    $region7: #{tpu_custom_call.1} parent=1 // pred_check_branch
      %23 = sbr.rel (0) target = $region9
    $region8: #{tpu_custom_call.1} parent=1 // pred_region
      %25 = vsyncadd [#allocation6], 0
      %s26 = sshll.u32 %s1, 4
      %s27 = int_to_ptr.hbm [resolvable:$true] %s26
      %s28 = sshll.u32 [#allocation5], 4
      %s29 = int_to_ptr.vmem [resolvable:$true] %s28
      %34 = dma.hbm_to_vmem [thread:$0]  %s27, 896, %s29, [#allocation6], 128, 128, 8
    $region9: #{tpu_custom_call.1} parent=1 // pred_fallthru
      _
    // Predicated region
    $region10: #{tpu_custom_call.1} parent=1 // pred_check
      _
    $region11: #{tpu_custom_call.1} parent=1 // pred_check_branch
      %36 = sbr.rel (0) target = $region13
    $region12: #{tpu_custom_call.1} parent=1 // pred_region
      _
    $region13: #{tpu_custom_call.1} parent=1 // pred_fallthru
      _
    // Predicated region
    $region14: #{tpu_custom_call.1} parent=1 // pred_check
      _
    $region15: #{tpu_custom_call.1} parent=1 // pred_check_branch
      %38 = sbr.rel (0) target = $region17
    $region16: #{tpu_custom_call.1} parent=1 // pred_region
      %40 = dma.done [#allocation3], 128
    $region17: #{tpu_custom_call.1} parent=1 // pred_fallthru
      _
    // Predicated region
    $region18: #{tpu_custom_call.1} parent=1 // pred_check
      _
    $region19: #{tpu_custom_call.1} parent=1 // pred_check_branch
      %42 = sbr.rel (0) target = $region21
    $region20: #{tpu_custom_call.1} parent=1 // pred_region
      %44 = dma.done [#allocation6], 896
    $region21: #{tpu_custom_call.1} parent=1 // pred_fallthru
      _
    %v45 = vld [vmem:[#allocation2] sm:$0xff]
    %v46 = vld [vmem:[#allocation5] sm:$0xff]
    %v47 = vld [vmem:[#allocation5 + $0x8] sm:$0xff]
    %v48 = vld [vmem:[#allocation5 + $0x10] sm:$0xff]
    %v49 = vld [vmem:[#allocation5 + $0x18] sm:$0xff]
    %v50 = vld [vmem:[#allocation5 + $0x20] sm:$0xff]
    %v51 = vld [vmem:[#allocation5 + $0x28] sm:$0xff]
    %v52 = vld [vmem:[#allocation5 + $0x30] sm:$0x3]
    %v53 = vld [vmem:[%s2] sm:$0x1]
    %v55 = vperm.slane %v53, 0
    %vm57 = vcmask 408576
    %v59 = vsel %vm57, %v45, 0
    %vm61 = vcmask 1041408
    %v63 = vsel %vm61, %v52, 0
    %65 = vmatpush.msra.mxu0 0.0
    %66 = vmatpush.msra.mxu0 0.0
    %67 = vmatpush.msra.mxu0 0.0
    %68 = vmatpush.msra.mxu0 0.0
    %69 = vmatpush.msra.mxu0 0.0
    %70 = vmatpush.msra.mxu0 0.0
    %71 = vmatpush.msra.mxu0 0.0
    %72 = vmatpush.msra.mxu0 0.0
    %73 = vmatpush.msra.mxu0 0.0
    %74 = vmatpush.msra.mxu0 %v63
    %75 = vmatpush.msra.mxu0 %v51
    %76 = vmatpush.msra.mxu0 %v50
    %77 = vmatpush.msra.mxu0 %v49
    %78 = vmatpush.msra.mxu0 %v48
    %79 = vmatpush.msra.mxu0 %v47
    %80 = vmatpush.msra.mxu0 %v46
    %81 = vmatmul.f32.gmra.mxu0 %v59
    %v82 = vpop.f32.mrf.mxu0
    %v83 = vadd.f32 %v55, %v82
    %84 = vdwg.mxu0
    %v85 = vmax.f32 %v83, 0.0
    %86 = vst [vmem:[#allocation7] sm:$0xff] %v85
    // Predicated region
    $region22: #{tpu_custom_call.1} parent=1 // pred_check
      _
    $region23: #{tpu_custom_call.1} parent=1 // pred_check_branch
      %88 = sbr.rel (0) target = $region25
    $region24: #{tpu_custom_call.1} parent=1 // pred_region
      %90 = vsyncadd [#allocation4], 0
      %s92 = sshll.u32 [#allocation7], 4
      %s93 = int_to_ptr.vmem [resolvable:$true] %s92
      %s94 = sshll.u32 %s3, 4
      %s95 = int_to_ptr.hbm [resolvable:$true] %s94
      %97 = dma.vmem_to_hbm [thread:$0]  %s93, 128, %s95, [#allocation4]
    $region25: #{tpu_custom_call.1} parent=1 // pred_fallthru
      _
    // Predicated region
    $region26: #{tpu_custom_call.1} parent=1 // pred_check
      _
    $region27: #{tpu_custom_call.1} parent=1 // pred_check_branch
      %99 = sbr.rel (0) target = $region29
    $region28: #{tpu_custom_call.1} parent=1 // pred_region
      %101 = dma.done [#allocation4], 128
    $region29: #{tpu_custom_call.1} parent=1 // pred_fallthru
      _
    %102 = vsyncpa [#allocation3], 1
    %103 = vsyncpa [#allocation6], 1
    %104 = vsyncpa [#allocation4], 1

</llo_original>
